<compile_context>
chip_gen: v5e
topology: v5e:2x2
jax: 0.10.0
libtpu: 0.0.40
codegen_flags: <defaults>
</compile_context>

<pallas_src>
import functools
import warnings

import jax
import jax.numpy as jnp
from jax.experimental import pallas as pl
from jax.experimental.pallas import tpu as pltpu


# --------------------------------------------------------------------------
# Hardware-aware sizing
# --------------------------------------------------------------------------
@functools.lru_cache(maxsize=1)
def _tpu_hw_params():
    """(physical VMEM bytes per core, min grid steps for megacore sharding)."""
    vmem_bytes = None
    try:
        info = pltpu.get_tpu_info()
        v = int(getattr(info, "vmem_capacity_bytes", 0))
        vmem_bytes = v if v > 0 else None
    except Exception:
        vmem_bytes = None
    if vmem_bytes is None:
        vmem_bytes = 64 << 20  # conservative default: v7x per-TC VMEM

    try:
        kind = jax.devices()[0].device_kind.lower()
    except Exception:
        kind = ""
    # Chips with 2 TensorCores sharing HBM: keep >=2 grid steps so the
    # "parallel" batch axis shards across both cores.  Single-TC chips
    # (v5e/v6e) should not shrink the block for that.
    multi_tc = any(tag in kind for tag in ("v7", "7x", "v4", "v5p"))
    min_grid_steps = 2 if multi_tc else 1
    return vmem_bytes, min_grid_steps


def _choose_b_tile(n, c, hw, itemsize, max_block_bytes, min_grid_steps):
    """Largest batch tile whose (b_tile, C, HW) block fits the budget, keeping
    at least `min_grid_steps` grid steps (no divisibility requirement)."""
    per_batch = max(1, c * hw * itemsize)
    cap = max(1, int(max_block_bytes) // per_batch)
    b_tile = max(1, min(n, cap))
    if min_grid_steps > 1 and n >= min_grid_steps:
        b_tile = min(b_tile, pl.cdiv(n, min_grid_steps))
    return b_tile


# --------------------------------------------------------------------------
# Fused kernel: pool + MLP + rescale, one (b_tile, C, HW) slab per grid step
# --------------------------------------------------------------------------
def _se_kernel(x_ref, w1t_ref, b1_ref, w2t_ref, b2_ref, o_ref, *, inv_hw):
    # Squeeze: global average pool over the spatial (lane) axis.  The block's
    # logical extent is exactly HW, so no padding correction is needed.
    pooled = jnp.sum(x_ref[...], axis=-1) * inv_hw                      # (B, C)

    # Excitation MLP, batched over the sub-batch (two small matmuls).
    h = jnp.dot(pooled, w1t_ref[...],
                preferred_element_type=jnp.float32) + b1_ref[...]       # (B, S)
    h = jnp.maximum(h, 0.0)                                             # delta
    s = jnp.dot(h, w2t_ref[...],
                preferred_element_type=jnp.float32) + b2_ref[...]       # (B, C)
    scale = jax.nn.sigmoid(s)                                           # sigma

    # Re-read x from VMEM for the rescale pass instead of keeping the whole
    # tile live in vregs across both consumers (avoids spills at large tiles).
    o_ref[...] = (x_ref[...] * scale[:, :, None]).astype(o_ref.dtype)


def _se_fused(x_flat, w1t, b1_2d, w2t, b2_2d, budget, min_grid_steps,
              vmem_limit):
    N, C, HW = x_flat.shape
    S = w1t.shape[1]
    b_tile = _choose_b_tile(N, C, HW, x_flat.dtype.itemsize,
                            budget, min_grid_steps)
    grid = (pl.cdiv(N, b_tile),)
    kernel = functools.partial(_se_kernel, inv_hw=1.0 / HW)

    return pl.pallas_call(
        kernel,
        out_shape=jax.ShapeDtypeStruct((N, C, HW), x_flat.dtype),
        grid_spec=pltpu.PrefetchScalarGridSpec(
            num_scalar_prefetch=0,
            grid=grid,
            in_specs=[
                pl.BlockSpec((b_tile, C, HW), lambda b: (b, 0, 0)),  # x slab
                pl.BlockSpec((C, S), lambda b: (0, 0)),              # w1.T
                pl.BlockSpec((1, S), lambda b: (0, 0)),              # b1
                pl.BlockSpec((S, C), lambda b: (0, 0)),              # w2.T
                pl.BlockSpec((1, C), lambda b: (0, 0)),              # b2
            ],
            out_specs=pl.BlockSpec((b_tile, C, HW), lambda b: (b, 0, 0)),
        ),
        # Each output tile depends only on its own input tile: reuse x's HBM.
        input_output_aliases={0: 0},
        compiler_params=pltpu.CompilerParams(
            dimension_semantics=("parallel",),
            vmem_limit_bytes=vmem_limit,
        ),
    )(x_flat, w1t, b1_2d, w2t, b2_2d)


# --------------------------------------------------------------------------
# Fallback: spatially-tiled two-pass scheme for very large per-image slabs
# --------------------------------------------------------------------------
def _pool_kernel(x_ref, w1t_ref, b1_ref, w2t_ref, b2_ref, scale_ref, acc_ref,
                 *, inv_hw, hw, s_tile):
    j = pl.program_id(1)

    @pl.when(j == 0)
    def _():
        acc_ref[...] = jnp.zeros_like(acc_ref)

    # Mask lanes past the true spatial extent (ragged last spatial tile holds
    # unspecified values) so they never enter the pooled sum.
    col = jax.lax.broadcasted_iota(jnp.int32, x_ref.shape, 2) + j * s_tile
    x = jnp.where(col < hw, x_ref[...], 0.0)
    acc_ref[...] += jnp.sum(x, axis=-1)                                 # (1, C)

    @pl.when(j == pl.num_programs(1) - 1)
    def _():
        pooled = acc_ref[...] * inv_hw                                  # (1, C)
        h = jnp.dot(pooled, w1t_ref[...],
                    preferred_element_type=jnp.float32) + b1_ref[...]   # (1, S)
        h = jnp.maximum(h, 0.0)
        s = jnp.dot(h, w2t_ref[...],
                    preferred_element_type=jnp.float32) + b2_ref[...]   # (1, C)
        scale_ref[...] = jax.nn.sigmoid(s)[:, None, :]                  # (1,1,C)


def _rescale_kernel(x_ref, scale_ref, o_ref):
    scale = scale_ref[0]                                                # (1, C)
    o_ref[...] = (x_ref[...] * scale[:, :, None]).astype(o_ref.dtype)


def _se_spatial_tiled(x_flat, w1t, b1_2d, w2t, b2_2d, budget, vmem_limit):
    N, C, HW = x_flat.shape
    S = w1t.shape[1]
    itemsize = x_flat.dtype.itemsize

    # Spatial tile: a multiple of 128 lanes that keeps the (1, C, s_tile)
    # block inside the budget.
    lane_groups_total = pl.cdiv(HW, 128)
    lane_groups = max(1, min(lane_groups_total,
                             int(budget) // max(1, C * itemsize * 128)))
    s_tile = lane_groups * 128
    n_sp = pl.cdiv(HW, s_tile)

    pool_kernel = functools.partial(_pool_kernel, inv_hw=1.0 / HW, hw=HW,
                                    s_tile=s_tile)
    # Pass 1: pooled mean + excitation MLP -> per-image channel scale.
    scale = pl.pallas_call(
        pool_kernel,
        out_shape=jax.ShapeDtypeStruct((N, 1, C), jnp.float32),
        grid_spec=pltpu.PrefetchScalarGridSpec(
            num_scalar_prefetch=0,
            grid=(N, n_sp),
            in_specs=[
                pl.BlockSpec((1, C, s_tile), lambda b, j: (b, 0, j)),
                pl.BlockSpec((C, S), lambda b, j: (0, 0)),
                pl.BlockSpec((1, S), lambda b, j: (0, 0)),
                pl.BlockSpec((S, C), lambda b, j: (0, 0)),
                pl.BlockSpec((1, C), lambda b, j: (0, 0)),
            ],
            out_specs=pl.BlockSpec((1, 1, C), lambda b, j: (b, 0, 0)),
            scratch_shapes=[pltpu.VMEM((1, C), jnp.float32)],
        ),
        compiler_params=pltpu.CompilerParams(
            dimension_semantics=("parallel", "arbitrary"),
            vmem_limit_bytes=vmem_limit,
        ),
    )(x_flat, w1t, b1_2d, w2t, b2_2d)

    # Pass 2: rescale x by the per-(image, channel) gate, spatially tiled.
    return pl.pallas_call(
        _rescale_kernel,
        out_shape=jax.ShapeDtypeStruct((N, C, HW), x_flat.dtype),
        grid_spec=pltpu.PrefetchScalarGridSpec(
            num_scalar_prefetch=0,
            grid=(N, n_sp),
            in_specs=[
                pl.BlockSpec((1, C, s_tile), lambda b, j: (b, 0, j)),
                pl.BlockSpec((1, 1, C), lambda b, j: (b, 0, 0)),
            ],
            out_specs=pl.BlockSpec((1, C, s_tile), lambda b, j: (b, 0, j)),
        ),
        input_output_aliases={0: 0},
        compiler_params=pltpu.CompilerParams(
            dimension_semantics=("parallel", "parallel"),
            vmem_limit_bytes=vmem_limit,
        ),
    )(x_flat, scale)


# --------------------------------------------------------------------------
# Public entry point
# --------------------------------------------------------------------------
@functools.partial(jax.jit, static_argnames=("block_budget_bytes",),
                   donate_argnums=(0,))
def se_layer(x, w1, b1, w2, b2, block_budget_bytes=None):
    """x: (N, C, H, W) f32; w1: (S, C); b1: (S,); w2: (C, S); b2: (C,)."""
    N, C, H, W = x.shape
    S = w1.shape[0]
    HW = H * W
    itemsize = x.dtype.itemsize

    vmem_bytes, min_grid_steps = _tpu_hw_params()
    vmem_limit = int(vmem_bytes * 0.8)          # ~51 MiB on v7x, ~102 MiB v5e/v6e
    budget = (int(block_budget_bytes) if block_budget_bytes is not None
              else vmem_bytes // 6)             # 4 buffers (in+out x2) + headroom

    # Pure reshape (no copy) so the input_output_aliases hit x's HBM buffer.
    x_flat = x.reshape(N, C, HW)
    # Pre-transpose the 1x1-conv weights so in-kernel matmuls need no transposes.
    w1t = w1.T                                  # (C, S)
    w2t = w2.T                                  # (S, C)
    b1_2d = b1.reshape(1, S)
    b2_2d = b2.reshape(1, C)

    if C * HW * itemsize <= budget:
        out_flat = _se_fused(x_flat, w1t, b1_2d, w2t, b2_2d,
                             budget, min_grid_steps, vmem_limit)
    else:
        out_flat = _se_spatial_tiled(x_flat, w1t, b1_2d, w2t, b2_2d,
                                     budget, vmem_limit)
    return out_flat.reshape(N, C, H, W)


def se_layer_ref(x, w1, b1, w2, b2):
    """Pure-JAX reference (mirrors the PyTorch module exactly)."""
    pooled = jnp.mean(x, axis=(2, 3), keepdims=True)                    # (N,C,1,1)
    h = jnp.einsum("sc,nchw->nshw", w1, pooled) + b1[None, :, None, None]
    h = jnp.maximum(h, 0.0)
    s = jnp.einsum("cs,nshw->nchw", w2, h) + b2[None, :, None, None]
    return jax.nn.sigmoid(s) * x


if __name__ == "__main__":
    # Buffer donation may warn if XLA cannot reuse a donated buffer; that is a
    # perf note, not an error — keep the output clean.
    warnings.filterwarnings("ignore", message=".*donat.*")

    def make_inputs(key, n, c, s, h, w):
        k_x, k_w1, k_b1, k_w2, k_b2 = jax.random.split(key, 5)
        x = jax.random.normal(k_x, (n, c, h, w), dtype=jnp.float32)
        w1 = jax.random.normal(k_w1, (s, c), dtype=jnp.float32) * 0.5
        b1 = jax.random.normal(k_b1, (s,), dtype=jnp.float32) * 0.1
        w2 = jax.random.normal(k_w2, (c, s), dtype=jnp.float32) * 0.5
        b2 = jax.random.normal(k_b2, (c,), dtype=jnp.float32) * 0.1
        return x, w1, b1, w2, b2

    k1, k2, k3 = jax.random.split(jax.random.PRNGKey(0), 3)

    # Test 1: module-sized shape (input_channels=4, squeeze_channels=2),
    # HW a multiple of 128 — fused path with auto-sized batch tile.
    x, w1, b1, w2, b2 = make_inputs(k1, 2, 4, 2, 16, 16)
    ref = se_layer_ref(x, w1, b1, w2, b2)
    out = jax.block_until_ready(se_layer(x, w1, b1, w2, b2))
    assert out.shape == ref.shape
    assert jnp.allclose(out, ref, atol=1e-5, rtol=1e-5)

    # Test 2: HW=14*14=196 (NOT a multiple of 128) and a batch tile that does
    # not divide N (ragged last block) — fused path with masked stores.
    x2, w12, b12, w22, b22 = make_inputs(k2, 3, 8, 4, 14, 14)
    ref2 = se_layer_ref(x2, w12, b12, w22, b22)
    out2 = jax.block_until_ready(
        se_layer(x2, w12, b12, w22, b22, block_budget_bytes=13000))
    assert jnp.allclose(out2, ref2, atol=1e-5, rtol=1e-5)

    # Test 3: force the spatially-tiled fallback (per-image slab > budget),
    # exercising the ragged spatial tile + pooled-sum masking.
    x3, w13, b13, w23, b23 = make_inputs(k3, 2, 8, 4, 14, 14)
    ref3 = se_layer_ref(x3, w13, b13, w23, b23)
    out3 = jax.block_until_ready(
        se_layer(x3, w13, b13, w23, b23, block_budget_bytes=4096))
    assert jnp.allclose(out3, ref3, atol=1e-5, rtol=1e-5)

    print("KERNEL_OK")
</pallas_src>

<mosaic_0001>
module attributes {stable_mosaic.version = 11 : i64} {
  func.func @_se_kernel(%arg0: i32, %arg1: memref<2x4x256xf32, #tpu.memory_space<vmem>>, %arg2: memref<4x2xf32, #tpu.memory_space<vmem>>, %arg3: memref<1x2xf32, #tpu.memory_space<vmem>>, %arg4: memref<2x4xf32, #tpu.memory_space<vmem>>, %arg5: memref<1x4xf32, #tpu.memory_space<vmem>>, %arg6: memref<2x4x256xf32, #tpu.memory_space<vmem>>) attributes {dimension_semantics = [#tpu.dimension_semantics<parallel>], iteration_bounds = array<i64: 1>, scalar_prefetch = 0 : i64, scratch_operands = 0 : i64, tpu.core_type = #tpu.core_type<tc>, window_params = [{transform_indices = @transform_0, window_bounds = array<i64: 2, 4, 256>}, {pipeline_mode = #tpu.pipeline_mode<synchronous>, transform_indices = @transform_1, window_bounds = array<i64: 4, 2>}, {pipeline_mode = #tpu.pipeline_mode<synchronous>, transform_indices = @transform_2, window_bounds = array<i64: 1, 2>}, {pipeline_mode = #tpu.pipeline_mode<synchronous>, transform_indices = @transform_3, window_bounds = array<i64: 2, 4>}, {pipeline_mode = #tpu.pipeline_mode<synchronous>, transform_indices = @transform_4, window_bounds = array<i64: 1, 4>}, {transform_indices = @transform_5, window_bounds = array<i64: 2, 4, 256>}]} {
    %c0 = arith.constant 0 : index
    %c0_0 = arith.constant 0 : index
    %c0_1 = arith.constant 0 : index
    %0 = vector.load %arg1[%c0, %c0_0, %c0_1] : memref<2x4x256xf32, #tpu.memory_space<vmem>>, vector<2x4x256xf32>
    %cst = arith.constant dense<0.000000e+00> : vector<2x4xf32>
    %1 = vector.multi_reduction <add>, %0, %cst [2] : vector<2x4x256xf32> to vector<2x4xf32>
    %cst_2 = arith.constant 3.906250e-03 : f32
    %2 = vector.broadcast %cst_2 : f32 to vector<2x4xf32>
    %3 = arith.mulf %1, %2 : vector<2x4xf32>
    %c0_3 = arith.constant 0 : index
    %c0_4 = arith.constant 0 : index
    %4 = vector.load %arg2[%c0_3, %c0_4] : memref<4x2xf32, #tpu.memory_space<vmem>>, vector<4x2xf32>
    %cst_5 = arith.constant dense<0.000000e+00> : vector<2x2xf32>
    %5 = tpu.matmul %3, %4, %cst_5 {dimension_numbers = #tpu.dot_dimension_numbers<[1], [0], [0], [1], [0, 0, 1, 1], [], []>} : vector<2x4xf32>, vector<4x2xf32>, vector<2x2xf32> -> vector<2x2xf32>
    %c0_6 = arith.constant 0 : index
    %c0_7 = arith.constant 0 : index
    %6 = vector.load %arg3[%c0_6, %c0_7] : memref<1x2xf32, #tpu.memory_space<vmem>>, vector<1x2xf32>
    %7 = vector.broadcast %6 : vector<1x2xf32> to vector<2x2xf32>
    %8 = arith.addf %5, %7 : vector<2x2xf32>
    %cst_8 = arith.constant 0.000000e+00 : f32
    %9 = vector.broadcast %cst_8 : f32 to vector<2x2xf32>
    %10 = arith.maximumf %8, %9 : vector<2x2xf32>
    %c0_9 = arith.constant 0 : index
    %c0_10 = arith.constant 0 : index
    %11 = vector.load %arg4[%c0_9, %c0_10] : memref<2x4xf32, #tpu.memory_space<vmem>>, vector<2x4xf32>
    %cst_11 = arith.constant dense<0.000000e+00> : vector<2x4xf32>
    %12 = tpu.matmul %10, %11, %cst_11 {dimension_numbers = #tpu.dot_dimension_numbers<[1], [0], [0], [1], [0, 0, 1, 1], [], []>} : vector<2x2xf32>, vector<2x4xf32>, vector<2x4xf32> -> vector<2x4xf32>
    %c0_12 = arith.constant 0 : index
    %c0_13 = arith.constant 0 : index
    %13 = vector.load %arg5[%c0_12, %c0_13] : memref<1x4xf32, #tpu.memory_space<vmem>>, vector<1x4xf32>
    %14 = vector.broadcast %13 : vector<1x4xf32> to vector<2x4xf32>
    %15 = arith.addf %12, %14 : vector<2x4xf32>
    %16 = arith.negf %15 : vector<2x4xf32>
    %17 = math.exp %16 : vector<2x4xf32>
    %cst_14 = arith.constant 1.000000e+00 : f32
    %18 = vector.broadcast %cst_14 : f32 to vector<2x4xf32>
    %19 = arith.addf %18, %17 : vector<2x4xf32>
    %20 = arith.divf %18, %19 : vector<2x4xf32>
    %c0_15 = arith.constant 0 : index
    %c0_16 = arith.constant 0 : index
    %c0_17 = arith.constant 0 : index
    %21 = vector.load %arg1[%c0_15, %c0_16, %c0_17] : memref<2x4x256xf32, #tpu.memory_space<vmem>>, vector<2x4x256xf32>
    %22 = vector.shape_cast %20 : vector<2x4xf32> to vector<2x4x1xf32>
    %23 = vector.broadcast %22 : vector<2x4x1xf32> to vector<2x4x256xf32>
    %24 = arith.mulf %21, %23 : vector<2x4x256xf32>
    %c0_18 = arith.constant 0 : index
    %c0_19 = arith.constant 0 : index
    %c0_20 = arith.constant 0 : index
    %25 = vector.load %arg6[%c0_18, %c0_19, %c0_20] : memref<2x4x256xf32, #tpu.memory_space<vmem>>, vector<2x4x256xf32>
    tpu.vector_store %arg6[%c0_18, %c0_19, %c0_20], %24 {strides = array<i32>} : memref<2x4x256xf32, #tpu.memory_space<vmem>>, vector<2x4x256xf32>,
    return
  }
  func.func @transform_0(%arg0: i32) -> (i32, i32, i32) {
    %c0_i32 = arith.constant 0 : i32
    %c0_i32_0 = arith.constant 0 : i32
    %c0_i32_1 = arith.constant 0 : i32
    return %arg0, %c0_i32, %c0_i32_0 : i32, i32, i32
  }
  func.func @transform_1(%arg0: i32) -> (i32, i32) {
    %c0_i32 = arith.constant 0 : i32
    %c0_i32_0 = arith.constant 0 : i32
    %c0_i32_1 = arith.constant 0 : i32
    return %c0_i32, %c0_i32_0 : i32, i32
  }
  func.func @transform_2(%arg0: i32) -> (i32, i32) {
    %c0_i32 = arith.constant 0 : i32
    %c0_i32_0 = arith.constant 0 : i32
    %c0_i32_1 = arith.constant 0 : i32
    return %c0_i32, %c0_i32_0 : i32, i32
  }
  func.func @transform_3(%arg0: i32) -> (i32, i32) {
    %c0_i32 = arith.constant 0 : i32
    %c0_i32_0 = arith.constant 0 : i32
    %c0_i32_1 = arith.constant 0 : i32
    return %c0_i32, %c0_i32_0 : i32, i32
  }
  func.func @transform_4(%arg0: i32) -> (i32, i32) {
    %c0_i32 = arith.constant 0 : i32
    %c0_i32_0 = arith.constant 0 : i32
    %c0_i32_1 = arith.constant 0 : i32
    return %c0_i32, %c0_i32_0 : i32, i32
  }
  func.func @transform_5(%arg0: i32) -> (i32, i32, i32) {
    %c0_i32 = arith.constant 0 : i32
    %c0_i32_0 = arith.constant 0 : i32
    %c0_i32_1 = arith.constant 0 : i32
    return %arg0, %c0_i32, %c0_i32_0 : i32, i32, i32
  }
}

</mosaic_0001>

<llo_original>
// kernel: se_layer.1
$region0: #{se_layer.1}
  #allocation0 [shape = 'u32[]', space=smem, size = 0x4, offset = 0x4, fixed_abs, tag = 'smem constant byte address 0x4 - core index']
  #allocation1 [shape = 'u32[72,128]{1,0:T(1,128)}', space=vmem, size = 0x9000, scoped, tag = 'internal scratch']
  %s0 = inlined_call_operand.vmem [shape: f32[2,4,256], index: 0, kind: input, shape index: {}, may-alias: {0,5}]
  %s1 = inlined_call_operand.vmem [shape: f32[4,2], index: 1, kind: input, shape index: {}]
  %s2 = inlined_call_operand.vmem [shape: f32[1,2], index: 2, kind: input, shape index: {}]
  %s3 = inlined_call_operand.vmem [shape: f32[2,4], index: 3, kind: input, shape index: {}]
  %s4 = inlined_call_operand.vmem [shape: f32[1,4], index: 4, kind: input, shape index: {}]
  %s5 = inlined_call_operand.vmem [shape: f32[2,4,256], index: 5, kind: output, shape index: {}, may-alias: {0,5}]
  %s6 = sld [smem:[#allocation0]]
  $region30: #{se_layer.1} parent=0
    _
  %s8 = ssub.s32 1, %s6
  %s9 = scalar_select 0, %s8, %s6
  // Predicated region
  $region2: #{se_layer.1} parent=0 // pred_check
    _
  $region3: #{se_layer.1} parent=0 // pred_check_branch
    %11 = sbr.rel (0) target = $region5
  $region4: #{se_layer.1} parent=0 // pred_region
    _
  $region5: #{se_layer.1} parent=0 // pred_fallthru
    _
  // Predicated region
  $region6: #{se_layer.1} parent=0 // pred_check
    _
  $region7: #{se_layer.1} parent=0 // pred_check_branch
    %13 = sbr.rel (0) target = $region9
  $region8: #{se_layer.1} parent=0 // pred_region
    _
  $region9: #{se_layer.1} parent=0 // pred_fallthru
    _
  // Predicated region
  $region10: #{se_layer.1} parent=0 // pred_check
    _
  $region11: #{se_layer.1} parent=0 // pred_check_branch
    %15 = sbr.rel (0) target = $region13
  $region12: #{se_layer.1} parent=0 // pred_region
    _
  $region13: #{se_layer.1} parent=0 // pred_fallthru
    _
  // Predicated region
  $region14: #{se_layer.1} parent=0 // pred_check
    _
  $region15: #{se_layer.1} parent=0 // pred_check_branch
    %17 = sbr.rel (0) target = $region17
  $region16: #{se_layer.1} parent=0 // pred_region
    _
  $region17: #{se_layer.1} parent=0 // pred_fallthru
    _
  // Predicated region
  $region18: #{se_layer.1} parent=0 // pred_check
    _
  $region19: #{se_layer.1} parent=0 // pred_check_branch
    %19 = sbr.rel (0) target = $region21
  $region20: #{se_layer.1} parent=0 // pred_region
    _
  $region21: #{se_layer.1} parent=0 // pred_fallthru
    _
  %v20 = vld [vmem:[%s0] sm:$0xff]
  %v21 = vld [vmem:[%s0 + $0x8] sm:$0xff]
  %24 = vst [vmem:[#allocation1] ss:$2 sm:$0xff] %v20
  %v25 = vld.sshfl [vmem:[#allocation1] sm:$0xff pattern:$0x75316420]
  %v26 = vld.sshfl [vmem:[#allocation1 + $0x8] sm:$0xff pattern:$0x75316420]
  %s27 = scalar_lea.vmem [#allocation1], 16
  %28 = vst [vmem:[%s27] ss:$2 sm:$0xff] %v21
  %v29 = vld.sshfl [vmem:[#allocation1 + $0x10] sm:$0xff pattern:$0x75316420]
  %v30 = vld.sshfl [vmem:[#allocation1 + $0x18] sm:$0xff pattern:$0x75316420]
  %vm35 = vcmask 1043456
  %v36 = vsel %vm35, %v25, 0.0
  %v37 = vsel %vm35, %v26, 0.0
  %v38 = vadd.f32 %v36, %v37
  %39 = vadd.xlane.f32.xlu0 %v38
  %v40 = vpop.xlane.xlu0 %39
  %v41 = vsel %vm35, %v29, 0.0
  %v42 = vsel %vm35, %v30, 0.0
  %v43 = vadd.f32 %v41, %v42
  %44 = vadd.xlane.f32.xlu0 %v43
  %v45 = vpop.xlane.xlu0 %44
  %v46 = vmul.f32 %v40, 0.00390625
  %v47 = vmul.f32 %v45, 0.00390625
  %v48 = vld [vmem:[%s1] sm:$0xf]
  %v49 = vld [vmem:[%s2] sm:$0x1]
  %v51 = vperm.slane %v49, 0
  %v55 = vlaneseq
  %v56 = vand.u32 %v55, 127
  %v57 = vperm.slane %v46, %v56
  %v58 = vperm.slane %v47, %v56
  %vm59 = vcmask 1041409
  %v60 = vsel %vm59, %v58, %v57
  %vm61 = vcmask 31744
  %v62 = vsel %vm61, %v60, 0
  %v65 = vsel %vm35, %v48, 0
  %67 = vmatpush.msra.mxu0 0.0
  %68 = vmatpush.msra.mxu0 0.0
  %69 = vmatpush.msra.mxu0 0.0
  %70 = vmatpush.msra.mxu0 0.0
  %71 = vmatpush.msra.mxu0 0.0
  %72 = vmatpush.msra.mxu0 0.0
  %73 = vmatpush.msra.mxu0 0.0
  %74 = vmatpush.msra.mxu0 0.0
  %75 = vmatpush.msra.mxu0 0.0
  %76 = vmatpush.msra.mxu0 0.0
  %77 = vmatpush.msra.mxu0 0.0
  %78 = vmatpush.msra.mxu0 0.0
  %79 = vmatpush.msra.mxu0 0.0
  %80 = vmatpush.msra.mxu0 0.0
  %81 = vmatpush.msra.mxu0 0.0
  %82 = vmatpush.msra.mxu0 %v65
  %83 = vmatmul.f32.gmra.mxu0 %v62
  %v84 = vpop.f32.mrf.mxu0
  %v85 = vadd.f32 %v51, %v84
  %86 = vdwg.mxu0
  %v87 = vmax.f32 %v85, 0.0
  %v88 = vld [vmem:[%s3] sm:$0x3]
  %v89 = vld [vmem:[%s4] sm:$0x1]
  %v91 = vperm.slane %v89, 0
  %vm93 = vcmask 15360
  %v95 = vsel %vm93, %v87, 0
  %vm97 = vcmask 1041408
  %v99 = vsel %vm97, %v88, 0
  %101 = vmatpush.msra.mxu0 0.0
  %102 = vmatpush.msra.mxu0 0.0
  %103 = vmatpush.msra.mxu0 0.0
  %104 = vmatpush.msra.mxu0 0.0
  %105 = vmatpush.msra.mxu0 0.0
  %106 = vmatpush.msra.mxu0 0.0
  %107 = vmatpush.msra.mxu0 0.0
  %108 = vmatpush.msra.mxu0 0.0
  %109 = vmatpush.msra.mxu0 0.0
  %110 = vmatpush.msra.mxu0 0.0
  %111 = vmatpush.msra.mxu0 0.0
  %112 = vmatpush.msra.mxu0 0.0
  %113 = vmatpush.msra.mxu0 0.0
  %114 = vmatpush.msra.mxu0 0.0
  %115 = vmatpush.msra.mxu0 0.0
  %116 = vmatpush.msra.mxu0 %v99
  %117 = vmatmul.f32.gmra.mxu0 %v95
  %v118 = vpop.f32.mrf.mxu0
  %v119 = vadd.f32 %v91, %v118
  %120 = vdwg.mxu0
  %v121 = vxor.u32 %v119, 2147483648
  %v122 = vmul.f32 %v121, 1.442695
  %v123 = vpow.pop %v122
  %v124 = vadd.f32 %v123, 1.0
  %v125 = vrcp.pop %v124
  %v126 = vmul.f32 %v124, %v125
  %v127 = vsub.f32 1.0, %v126
  %v128 = vmul.f32 %v125, %v127
  %v129 = vadd.f32 %v125, %v128
  %vm130 = vweird.f32 %v124
  %vm131 = vweird.f32 %v125
  %vm132 = vmor %vm130, %vm131
  %v133 = vsel %vm132, %v125, %v129
  %v134 = vand.u32 2147483647, %v124
  %vm135 = vcmp.eq.f32.partialorder %v134, 8.507059e+37
  %v136 = vand.u32 %v124, 2147483648
  %v137 = vor.u32 1.1754944e-38, %v136
  %v138 = vsel %vm135, %v137, %v133
  %v139 = vmul.f32 1.0, %v138
  %v140 = vperm.slane %v139, 0
  %v141 = vlaneseq
  %v142 = vshrl.u32 %v141, 7
  %144 = vset.pattern.permute.xlu0 %v142
  %145 = vperm.xlu0 %144, %v140
  %v146 = vpop.permute.xlu0 %145
  %v147 = vperm.slane %v139, 1
  %v148 = vlaneseq
  %v149 = vshrl.u32 %v148, 7
  %151 = vset.pattern.permute.xlu0 %v149
  %152 = vperm.xlu0 %151, %v147
  %v153 = vpop.permute.xlu0 %152
  %v157 = vunpack.c.l.s4 839922192
  %v158 = vunpack.c.0.s8 %v157
  %v159 = vperm.slane %v146, %v158
  %v161 = vunpack.c.l.s4 839922192
  %v162 = vunpack.c.0.s8 %v161
  %v163 = vperm.slane %v153, %v162
  %v166 = vmul.f32 %v20, %v159
  %v167 = vmul.f32 %v21, %v163
  %168 = vst [vmem:[%s5] sm:$0xff] %v166
  %169 = vst [vmem:[%s5 + $0x8] sm:$0xff] %v167
  // Predicated region
  $region22: #{se_layer.1} parent=0 // pred_check
    _
  $region23: #{se_layer.1} parent=0 // pred_check_branch
    %171 = sbr.rel (0) target = $region25
  $region24: #{se_layer.1} parent=0 // pred_region
    _
  $region25: #{se_layer.1} parent=0 // pred_fallthru
    _
  // Predicated region
  $region26: #{se_layer.1} parent=0 // pred_check
    _
  $region27: #{se_layer.1} parent=0 // pred_check_branch
    %173 = sbr.rel (0) target = $region29
  $region28: #{se_layer.1} parent=0 // pred_region
    _
  $region29: #{se_layer.1} parent=0 // pred_fallthru
    _

</llo_original>
